<compile_context>
chip_gen: v5e
topology: v5e:2x2
jax: 0.10.0
libtpu: 0.0.40
codegen_flags: <defaults>
</compile_context>

<pallas_src>
import functools

import jax
import jax.numpy as jnp
from jax import lax
from jax.experimental import pallas as pl
from jax.experimental.pallas import tpu as pltpu

D_IN = 512
H1 = 256
H2 = 128
N_CLASSES = 5


def _gelu(x, approximate=False):
    if approximate:
        # tanh-approx GELU: transcendental goes to the EUP slot (co-issues with
        # MXU/VALU) — useful on v5e. Off by default to match nn.GELU() (erf).
        return jax.nn.gelu(x, approximate=True)
    # PyTorch nn.GELU() default is the exact (erf-based) GELU.
    return 0.5 * x * (1.0 + lax.erf(x * 0.7071067811865476))


def _sleep_mlp_kernel(x_ref, w1_ref, b1_ref, w2_ref, b2_ref, w3t_ref, o_ref,
                      *, approximate_gelu):
    """Fused MLP on a (tm, 512) row tile; emits the transposed (C, tm) output tile."""
    x = x_ref[...]                                                   # (tm, 512) f32, read once
    h = jnp.dot(x, w1_ref[...], preferred_element_type=jnp.float32)  # (tm, H1)
    h = _gelu(h + b1_ref[...], approximate_gelu)
    # Dropout: identity in eval/inference mode.
    # TODO(synk): add stochastic dropout via pltpu.prng_* for training mode.
    h = jnp.dot(h, w2_ref[...], preferred_element_type=jnp.float32)  # (tm, H2)
    h = _gelu(h + b2_ref[...], approximate_gelu)
    # Transposed classifier: (C, H2) contracted with (tm, H2) over H2 -> (C, tm).
    # Lane dim = tm (>=128 for multi-block grids) -> dense, unmasked stores.
    o_ref[...] = lax.dot_general(
        w3t_ref[...], h,
        dimension_numbers=(((1,), (1,)), ((), ())),
        preferred_element_type=jnp.float32,
    )


def _round_up(v, m):
    return ((v + m - 1) // m) * m


@functools.partial(jax.jit, static_argnames=("tm", "approximate_gelu"))
def sleep_mlp_forward(x, w1, b1, w2, b2, w3, *, tm=1024, approximate_gelu=False):
    """x: (B, T, 512) f32  ->  (B, C, T) f32 (matches PyTorch permute(0, 2, 1))."""
    B, T, D = x.shape
    assert D == D_IN
    assert tm % 128 == 0, "tm must be a multiple of 128 (lane-dense output tile)"
    rows = B * T

    # No dtype cast of x here: the kernel consumes f32 directly (single HBM read).
    x2 = x.reshape(rows, D)                       # free leading-dim collapse
    w3t = jnp.transpose(w3)                       # (C, H2); tiny one-time relayout
    b1f = b1.reshape(1, H1).astype(jnp.float32)
    b2f = b2.reshape(1, H2).astype(jnp.float32)

    # Row-tile size: a single full block only for tiny inputs; otherwise at least
    # two grid steps so v7x's second TensorCore gets work. Partial last block is
    # masked by Pallas (all math is row-independent, so garbage tail rows never
    # mix with valid rows).
    if rows <= 256:
        tm_eff = rows
    else:
        tm_eff = min(tm, _round_up(pl.cdiv(rows, 2), 128))
    grid = (pl.cdiv(rows, tm_eff),)

    cost = pl.CostEstimate(
        flops=2 * rows * (D_IN * H1 + H1 * H2 + H2 * N_CLASSES),
        transcendentals=rows * (H1 + H2),
        bytes_accessed=(4 * rows * D_IN                                # f32 x, read once
                        + 4 * (D_IN * H1 + H1 * H2 + H2 * N_CLASSES)   # f32 weights
                        + 4 * (H1 + H2)                                # f32 biases
                        + 4 * rows * N_CLASSES),                       # f32 output
    )

    out_t = pl.pallas_call(
        functools.partial(_sleep_mlp_kernel, approximate_gelu=approximate_gelu),
        out_shape=jax.ShapeDtypeStruct((N_CLASSES, rows), jnp.float32),
        grid_spec=pltpu.PrefetchScalarGridSpec(
            num_scalar_prefetch=0,
            grid=grid,
            in_specs=[
                pl.BlockSpec((tm_eff, D_IN), lambda i: (i, 0)),        # x row tile
                pl.BlockSpec((D_IN, H1), lambda i: (0, 0)),            # W1 (resident)
                pl.BlockSpec((1, H1), lambda i: (0, 0)),               # b1
                pl.BlockSpec((H1, H2), lambda i: (0, 0)),              # W2 (resident)
                pl.BlockSpec((1, H2), lambda i: (0, 0)),               # b2
                pl.BlockSpec((N_CLASSES, H2), lambda i: (0, 0)),       # W3^T (no bias)
            ],
            out_specs=pl.BlockSpec((N_CLASSES, tm_eff), lambda i: (0, i)),
        ),
        compiler_params=pltpu.CompilerParams(
            dimension_semantics=("parallel",),        # shards row tiles across v7x's 2 TCs
            vmem_limit_bytes=32 * 1024 * 1024,        # explicit budget (safe on v5e/v6e/v7x)
        ),
        cost_estimate=cost,
    )(x2, w1, b1f, w2, b2f, w3t)

    # (C, B*T) -> (B, C, T): equivalent to PyTorch's permute(0, 2, 1); tiny
    # major-dim relayout of a 5-row tensor (no minor-dim transpose, no big copy).
    return jnp.transpose(out_t.reshape(N_CLASSES, B, T), (1, 0, 2))


def init_params(key):
    """Deterministic synthetic parameters (math layout: y = x @ W + b, W is (in, out))."""
    k1, k2, k3, k4, k5 = jax.random.split(key, 5)
    w1 = jax.random.normal(k1, (D_IN, H1), jnp.float32) * (1.0 / jnp.sqrt(D_IN))
    b1 = jax.random.normal(k2, (1, H1), jnp.float32) * 0.01
    w2 = jax.random.normal(k3, (H1, H2), jnp.float32) * (1.0 / jnp.sqrt(H1))
    b2 = jax.random.normal(k4, (1, H2), jnp.float32) * 0.01
    w3 = jax.random.normal(k5, (H2, N_CLASSES), jnp.float32) * (1.0 / jnp.sqrt(H2))
    return w1, b1, w2, b2, w3


def _reference(x, w1, b1, w2, b2, w3):
    """Plain-JAX f32 reference matching the PyTorch forward."""
    h = _gelu(jnp.dot(x, w1) + b1)
    h = _gelu(jnp.dot(h, w2) + b2)
    o = jnp.dot(h, w3)
    return jnp.transpose(o, (0, 2, 1))


if __name__ == "__main__":
    key = jax.random.PRNGKey(0)
    kx, kp = jax.random.split(key)
    params = init_params(kp)

    # Small shape consistent with the module: (B, T, 512) -> (B, 5, T).
    B, T = 2, 8
    x = jax.random.normal(kx, (B, T, D_IN), jnp.float32)

    out = jax.block_until_ready(sleep_mlp_forward(x, *params))
    assert out.shape == (B, N_CLASSES, T), out.shape

    ref = _reference(x, *params)
    assert jnp.allclose(out, ref, atol=5e-2, rtol=5e-2), \
        float(jnp.max(jnp.abs(out - ref)))

    # Also exercise a multi-step grid: rows=600 > 256 so the heuristic splits into
    # >=2 parallel blocks with a masked partial last block.
    B2, T2 = 3, 200
    x_big = jax.random.normal(kx, (B2, T2, D_IN), jnp.float32)
    out_big = jax.block_until_ready(sleep_mlp_forward(x_big, *params, tm=256))
    ref_big = _reference(x_big, *params)
    assert out_big.shape == (B2, N_CLASSES, T2), out_big.shape
    assert jnp.allclose(out_big, ref_big, atol=5e-2, rtol=5e-2), \
        float(jnp.max(jnp.abs(out_big - ref_big)))

    print("KERNEL_OK")
</pallas_src>

<mosaic_0001>
module attributes {stable_mosaic.version = 11 : i64} {
  func.func @_sleep_mlp_kernel(%arg0: i32, %arg1: memref<16x512xf32, #tpu.memory_space<vmem>>, %arg2: memref<512x256xf32, #tpu.memory_space<vmem>>, %arg3: memref<1x256xf32, #tpu.memory_space<vmem>>, %arg4: memref<256x128xf32, #tpu.memory_space<vmem>>, %arg5: memref<1x128xf32, #tpu.memory_space<vmem>>, %arg6: memref<5x128xf32, #tpu.memory_space<vmem>>, %arg7: memref<5x16xf32, #tpu.memory_space<vmem>>) attributes {dimension_semantics = [#tpu.dimension_semantics<parallel>], iteration_bounds = array<i64: 1>, scalar_prefetch = 0 : i64, scratch_operands = 0 : i64, tpu.core_type = #tpu.core_type<tc>, window_params = [{transform_indices = @transform_0, window_bounds = array<i64: 16, 512>}, {pipeline_mode = #tpu.pipeline_mode<synchronous>, transform_indices = @transform_1, window_bounds = array<i64: 512, 256>}, {pipeline_mode = #tpu.pipeline_mode<synchronous>, transform_indices = @transform_2, window_bounds = array<i64: 1, 256>}, {pipeline_mode = #tpu.pipeline_mode<synchronous>, transform_indices = @transform_3, window_bounds = array<i64: 256, 128>}, {pipeline_mode = #tpu.pipeline_mode<synchronous>, transform_indices = @transform_4, window_bounds = array<i64: 1, 128>}, {pipeline_mode = #tpu.pipeline_mode<synchronous>, transform_indices = @transform_5, window_bounds = array<i64: 5, 128>}, {transform_indices = @transform_6, window_bounds = array<i64: 5, 16>}]} {
    %c0 = arith.constant 0 : index
    %c0_0 = arith.constant 0 : index
    %0 = vector.load %arg1[%c0, %c0_0] : memref<16x512xf32, #tpu.memory_space<vmem>>, vector<16x512xf32>
    %c0_1 = arith.constant 0 : index
    %c0_2 = arith.constant 0 : index
    %1 = vector.load %arg2[%c0_1, %c0_2] : memref<512x256xf32, #tpu.memory_space<vmem>>, vector<512x256xf32>
    %cst = arith.constant dense<0.000000e+00> : vector<16x256xf32>
    %2 = tpu.matmul %0, %1, %cst {dimension_numbers = #tpu.dot_dimension_numbers<[1], [0], [0], [1], [0, 0, 1, 1], [], []>} : vector<16x512xf32>, vector<512x256xf32>, vector<16x256xf32> -> vector<16x256xf32>
    %c0_3 = arith.constant 0 : index
    %c0_4 = arith.constant 0 : index
    %3 = vector.load %arg3[%c0_3, %c0_4] : memref<1x256xf32, #tpu.memory_space<vmem>>, vector<1x256xf32>
    %4 = vector.broadcast %3 : vector<1x256xf32> to vector<16x256xf32>
    %5 = arith.addf %2, %4 : vector<16x256xf32>
    %cst_5 = arith.constant 5.000000e-01 : f32
    %6 = vector.broadcast %cst_5 : f32 to vector<16x256xf32>
    %7 = arith.mulf %6, %5 : vector<16x256xf32>
    %cst_6 = arith.constant 0.707106769 : f32
    %8 = vector.broadcast %cst_6 : f32 to vector<16x256xf32>
    %9 = arith.mulf %5, %8 : vector<16x256xf32>
    %10 = math.erf %9 : vector<16x256xf32>
    %cst_7 = arith.constant 1.000000e+00 : f32
    %11 = vector.broadcast %cst_7 : f32 to vector<16x256xf32>
    %12 = arith.addf %11, %10 : vector<16x256xf32>
    %13 = arith.mulf %7, %12 : vector<16x256xf32>
    %c0_8 = arith.constant 0 : index
    %c0_9 = arith.constant 0 : index
    %14 = vector.load %arg4[%c0_8, %c0_9] : memref<256x128xf32, #tpu.memory_space<vmem>>, vector<256x128xf32>
    %cst_10 = arith.constant dense<0.000000e+00> : vector<16x128xf32>
    %15 = tpu.matmul %13, %14, %cst_10 {dimension_numbers = #tpu.dot_dimension_numbers<[1], [0], [0], [1], [0, 0, 1, 1], [], []>} : vector<16x256xf32>, vector<256x128xf32>, vector<16x128xf32> -> vector<16x128xf32>
    %c0_11 = arith.constant 0 : index
    %c0_12 = arith.constant 0 : index
    %16 = vector.load %arg5[%c0_11, %c0_12] : memref<1x128xf32, #tpu.memory_space<vmem>>, vector<1x128xf32>
    %17 = vector.broadcast %16 : vector<1x128xf32> to vector<16x128xf32>
    %18 = arith.addf %15, %17 : vector<16x128xf32>
    %cst_13 = arith.constant 5.000000e-01 : f32
    %19 = vector.broadcast %cst_13 : f32 to vector<16x128xf32>
    %20 = arith.mulf %19, %18 : vector<16x128xf32>
    %cst_14 = arith.constant 0.707106769 : f32
    %21 = vector.broadcast %cst_14 : f32 to vector<16x128xf32>
    %22 = arith.mulf %18, %21 : vector<16x128xf32>
    %23 = math.erf %22 : vector<16x128xf32>
    %cst_15 = arith.constant 1.000000e+00 : f32
    %24 = vector.broadcast %cst_15 : f32 to vector<16x128xf32>
    %25 = arith.addf %24, %23 : vector<16x128xf32>
    %26 = arith.mulf %20, %25 : vector<16x128xf32>
    %c0_16 = arith.constant 0 : index
    %c0_17 = arith.constant 0 : index
    %27 = vector.load %arg6[%c0_16, %c0_17] : memref<5x128xf32, #tpu.memory_space<vmem>>, vector<5x128xf32>
    %cst_18 = arith.constant dense<0.000000e+00> : vector<5x16xf32>
    %28 = tpu.matmul %27, %26, %cst_18 {dimension_numbers = #tpu.dot_dimension_numbers<[1], [1], [0], [0], [0, 0, 1, 0], [], []>} : vector<5x128xf32>, vector<16x128xf32>, vector<5x16xf32> -> vector<5x16xf32>
    %c0_19 = arith.constant 0 : index
    %c0_20 = arith.constant 0 : index
    %29 = vector.load %arg7[%c0_19, %c0_20] : memref<5x16xf32, #tpu.memory_space<vmem>>, vector<5x16xf32>
    tpu.vector_store %arg7[%c0_19, %c0_20], %28 {strides = array<i32>} : memref<5x16xf32, #tpu.memory_space<vmem>>, vector<5x16xf32>,
    return
  }
  func.func @transform_0(%arg0: i32) -> (i32, i32) {
    %c0_i32 = arith.constant 0 : i32
    %c0_i32_0 = arith.constant 0 : i32
    return %arg0, %c0_i32 : i32, i32
  }
  func.func @transform_1(%arg0: i32) -> (i32, i32) {
    %c0_i32 = arith.constant 0 : i32
    %c0_i32_0 = arith.constant 0 : i32
    %c0_i32_1 = arith.constant 0 : i32
    return %c0_i32, %c0_i32_0 : i32, i32
  }
  func.func @transform_2(%arg0: i32) -> (i32, i32) {
    %c0_i32 = arith.constant 0 : i32
    %c0_i32_0 = arith.constant 0 : i32
    %c0_i32_1 = arith.constant 0 : i32
    return %c0_i32, %c0_i32_0 : i32, i32
  }
  func.func @transform_3(%arg0: i32) -> (i32, i32) {
    %c0_i32 = arith.constant 0 : i32
    %c0_i32_0 = arith.constant 0 : i32
    %c0_i32_1 = arith.constant 0 : i32
    return %c0_i32, %c0_i32_0 : i32, i32
  }
  func.func @transform_4(%arg0: i32) -> (i32, i32) {
    %c0_i32 = arith.constant 0 : i32
    %c0_i32_0 = arith.constant 0 : i32
    %c0_i32_1 = arith.constant 0 : i32
    return %c0_i32, %c0_i32_0 : i32, i32
  }
  func.func @transform_5(%arg0: i32) -> (i32, i32) {
    %c0_i32 = arith.constant 0 : i32
    %c0_i32_0 = arith.constant 0 : i32
    %c0_i32_1 = arith.constant 0 : i32
    return %c0_i32, %c0_i32_0 : i32, i32
  }
  func.func @transform_6(%arg0: i32) -> (i32, i32) {
    %c0_i32 = arith.constant 0 : i32
    %c0_i32_0 = arith.constant 0 : i32
    return %c0_i32, %arg0 : i32, i32
  }
}

</mosaic_0001>

<llo_original>
// kernel: sleep_mlp_forward.1
$region0: #{sleep_mlp_forward.1}
  #allocation0 [shape = 'u32[]', space=smem, size = 0x4, offset = 0x4, fixed_abs, tag = 'smem constant byte address 0x4 - core index']
  #allocation1 [shape = 'u32[72,128]{1,0:T(1,128)}', space=vmem, size = 0x9000, scoped, tag = 'internal scratch']
  %s0 = inlined_call_operand.hbm [shape: f32[16,512], index: 0, kind: input, shape index: {}]
  %s1 = inlined_call_operand.hbm [shape: f32[512,256], index: 1, kind: input, shape index: {}]
  %s2 = inlined_call_operand.vmem [shape: f32[1,256], index: 2, kind: input, shape index: {}]
  %s3 = inlined_call_operand.hbm [shape: f32[256,128], index: 3, kind: input, shape index: {}]
  %s4 = inlined_call_operand.vmem [shape: f32[1,128], index: 4, kind: input, shape index: {}]
  %s5 = inlined_call_operand.hbm [shape: f32[5,128], index: 5, kind: input, shape index: {}]
  %s6 = inlined_call_operand.vmem [shape: f32[5,16], index: 6, kind: output, shape index: {}]
  %s7 = sld [smem:[#allocation0]]
  $region50: #{sleep_mlp_forward.1} parent=0
    _
  %s9 = ssub.s32 1, %s7
  %s10 = scalar_select 0, %s9, %s7
  $region1: #{sleep_mlp_forward.1} parent=0
    #allocation2 [shape = 'u8[32768]{0}', space=vmem, size = 0x8000, scoped, tag = 'input window, operand 0, single buffered']
    #allocation3 [shape = 's32[1]{0}', space=sflag, size = 0x4, scoped, tag = 'scoped memory for sleep_mlp_forward.1']
    #allocation4 [shape = 'u8[524288]{0}', space=vmem, size = 0x80000, scoped, tag = 'input window, operand 1, single buffered']
    #allocation5 [shape = 's32[1]{0}', space=sflag, size = 0x4, scoped, tag = 'scoped memory for sleep_mlp_forward.1']
    #allocation6 [shape = 'u8[131072]{0}', space=vmem, size = 0x20000, scoped, tag = 'input window, operand 3, single buffered']
    #allocation7 [shape = 'u8[4096]{0}', space=vmem, size = 0x1000, scoped, tag = 'input window, operand 5, single buffered']
    #allocation8 [shape = 's32[1]{0}', space=sflag, size = 0x4, scoped, tag = 'scoped memory for sleep_mlp_forward.1']
    %11 = vsyncpa [#allocation3], 0
    %12 = vsyncpa [#allocation5], 0
    %13 = vsyncpa [#allocation8], 0
    // Predicated region
    $region2: #{sleep_mlp_forward.1} parent=1 // pred_check
      _
    $region3: #{sleep_mlp_forward.1} parent=1 // pred_check_branch
      %15 = sbr.rel (0) target = $region5
    $region4: #{sleep_mlp_forward.1} parent=1 // pred_region
      %17 = vsyncadd [#allocation3], 0
      %s18 = sshll.u32 %s0, 4
      %s19 = int_to_ptr.hbm [resolvable:$true] %s18
      %s20 = sshll.u32 [#allocation2], 4
      %s21 = int_to_ptr.vmem [resolvable:$true] %s20
      %26 = dma.hbm_to_vmem [thread:$0]  %s19, 1024, %s21, [#allocation3], 512, 512, 32
    $region5: #{sleep_mlp_forward.1} parent=1 // pred_fallthru
      _
    // Predicated region
    $region6: #{sleep_mlp_forward.1} parent=1 // pred_check
      _
    $region7: #{sleep_mlp_forward.1} parent=1 // pred_check_branch
      %28 = sbr.rel (0) target = $region9
    $region8: #{sleep_mlp_forward.1} parent=1 // pred_region
      %30 = vsyncadd [#allocation5], 0
      %s31 = sshll.u32 %s1, 4
      %s32 = int_to_ptr.hbm [resolvable:$true] %s31
      %s33 = sshll.u32 [#allocation4], 4
      %s34 = int_to_ptr.vmem [resolvable:$true] %s33
      %39 = dma.hbm_to_vmem [thread:$0]  %s32, 16384, %s34, [#allocation5], 256, 256, 16
    $region9: #{sleep_mlp_forward.1} parent=1 // pred_fallthru
      _
    // Predicated region
    $region10: #{sleep_mlp_forward.1} parent=1 // pred_check
      _
    $region11: #{sleep_mlp_forward.1} parent=1 // pred_check_branch
      %41 = sbr.rel (0) target = $region13
    $region12: #{sleep_mlp_forward.1} parent=1 // pred_region
      _
    $region13: #{sleep_mlp_forward.1} parent=1 // pred_fallthru
      _
    // Predicated region
    $region14: #{sleep_mlp_forward.1} parent=1 // pred_check
      _
    $region15: #{sleep_mlp_forward.1} parent=1 // pred_check_branch
      %43 = sbr.rel (0) target = $region17
    $region16: #{sleep_mlp_forward.1} parent=1 // pred_region
      %45 = vsyncadd [#allocation5], 0
      %s46 = sshll.u32 %s3, 4
      %s47 = int_to_ptr.hbm [resolvable:$true] %s46
      %s48 = sshll.u32 [#allocation6], 4
      %s49 = int_to_ptr.vmem [resolvable:$true] %s48
      %54 = dma.hbm_to_vmem [thread:$0]  %s47, 4096, %s49, [#allocation5], 128, 128, 8
    $region17: #{sleep_mlp_forward.1} parent=1 // pred_fallthru
      _
    // Predicated region
    $region18: #{sleep_mlp_forward.1} parent=1 // pred_check
      _
    $region19: #{sleep_mlp_forward.1} parent=1 // pred_check_branch
      %56 = sbr.rel (0) target = $region21
    $region20: #{sleep_mlp_forward.1} parent=1 // pred_region
      _
    $region21: #{sleep_mlp_forward.1} parent=1 // pred_fallthru
      _
    // Predicated region
    $region22: #{sleep_mlp_forward.1} parent=1 // pred_check
      _
    $region23: #{sleep_mlp_forward.1} parent=1 // pred_check_branch
      %58 = sbr.rel (0) target = $region25
    $region24: #{sleep_mlp_forward.1} parent=1 // pred_region
      %60 = vsyncadd [#allocation8], 0
      %s62 = sshll.u32 %s5, 4
      %s63 = int_to_ptr.hbm [resolvable:$true] %s62
      %s64 = sshll.u32 [#allocation7], 4
      %s65 = int_to_ptr.vmem [resolvable:$true] %s64
      %67 = dma.hbm_to_vmem [thread:$0]  %s63, 128, %s65, [#allocation8]
    $region25: #{sleep_mlp_forward.1} parent=1 // pred_fallthru
      _
    // Predicated region
    $region26: #{sleep_mlp_forward.1} parent=1 // pred_check
      _
    $region27: #{sleep_mlp_forward.1} parent=1 // pred_check_branch
      %69 = sbr.rel (0) target = $region29
    $region28: #{sleep_mlp_forward.1} parent=1 // pred_region
      %71 = dma.done [#allocation3], 1024
    $region29: #{sleep_mlp_forward.1} parent=1 // pred_fallthru
      _
    // Predicated region
    $region30: #{sleep_mlp_forward.1} parent=1 // pred_check
      _
    $region31: #{sleep_mlp_forward.1} parent=1 // pred_check_branch
      %73 = sbr.rel (0) target = $region33
    $region32: #{sleep_mlp_forward.1} parent=1 // pred_region
      %75 = dma.done [#allocation5], 16384
    $region33: #{sleep_mlp_forward.1} parent=1 // pred_fallthru
      _
    // Predicated region
    $region34: #{sleep_mlp_forward.1} parent=1 // pred_check
      _
    $region35: #{sleep_mlp_forward.1} parent=1 // pred_check_branch
      %77 = sbr.rel (0) target = $region37
    $region36: #{sleep_mlp_forward.1} parent=1 // pred_region
      %79 = dma.done [#allocation5], 4096
    $region37: #{sleep_mlp_forward.1} parent=1 // pred_fallthru
      _
    // Predicated region
    $region38: #{sleep_mlp_forward.1} parent=1 // pred_check
      _
    $region39: #{sleep_mlp_forward.1} parent=1 // pred_check_branch
      %81 = sbr.rel (0) target = $region41
    $region40: #{sleep_mlp_forward.1} parent=1 // pred_region
      %83 = dma.done [#allocation8], 128
    $region41: #{sleep_mlp_forward.1} parent=1 // pred_fallthru
      _
    %v84 = vld [vmem:[#allocation2] sm:$0xff]
    %v85 = vld [vmem:[#allocation2 + $0x8] sm:$0xff]
    %v86 = vld [vmem:[#allocation2 + $0x10] sm:$0xff]
    %v87 = vld [vmem:[#allocation2 + $0x18] sm:$0xff]
    %v88 = vld [vmem:[#allocation2 + $0x20] sm:$0xff]
    %v89 = vld [vmem:[#allocation2 + $0x28] sm:$0xff]
    %v90 = vld [vmem:[#allocation2 + $0x30] sm:$0xff]
    %v91 = vld [vmem:[#allocation2 + $0x38] sm:$0xff]
    %v92 = vld [vmem:[#allocation4] sm:$0xff]
    %v93 = vld [vmem:[#allocation4 + $0x8] sm:$0xff]
    %v94 = vld [vmem:[#allocation4 + $0x10] sm:$0xff]
    %v95 = vld [vmem:[#allocation4 + $0x18] sm:$0xff]
    %v96 = vld [vmem:[#allocation4 + $0x20] sm:$0xff]
    %v97 = vld [vmem:[#allocation4 + $0x28] sm:$0xff]
    %v98 = vld [vmem:[#allocation4 + $0x30] sm:$0xff]
    %v99 = vld [vmem:[#allocation4 + $0x38] sm:$0xff]
    %v100 = vld [vmem:[#allocation4 + $0x40] sm:$0xff]
    %v101 = vld [vmem:[#allocation4 + $0x48] sm:$0xff]
    %v102 = vld [vmem:[#allocation4 + $0x50] sm:$0xff]
    %v103 = vld [vmem:[#allocation4 + $0x58] sm:$0xff]
    %v104 = vld [vmem:[#allocation4 + $0x60] sm:$0xff]
    %v105 = vld [vmem:[#allocation4 + $0x68] sm:$0xff]
    %v106 = vld [vmem:[#allocation4 + $0x70] sm:$0xff]
    %v107 = vld [vmem:[#allocation4 + $0x78] sm:$0xff]
    %v108 = vld [vmem:[#allocation4 + $0x80] sm:$0xff]
    %v109 = vld [vmem:[#allocation4 + $0x88] sm:$0xff]
    %v110 = vld [vmem:[#allocation4 + $0x90] sm:$0xff]
    %v111 = vld [vmem:[#allocation4 + $0x98] sm:$0xff]
    %v112 = vld [vmem:[#allocation4 + $0xa0] sm:$0xff]
    %v113 = vld [vmem:[#allocation4 + $0xa8] sm:$0xff]
    %v114 = vld [vmem:[#allocation4 + $0xb0] sm:$0xff]
    %v115 = vld [vmem:[#allocation4 + $0xb8] sm:$0xff]
    %v116 = vld [vmem:[#allocation4 + $0xc0] sm:$0xff]
    %v117 = vld [vmem:[#allocation4 + $0xc8] sm:$0xff]
    %v118 = vld [vmem:[#allocation4 + $0xd0] sm:$0xff]
    %v119 = vld [vmem:[#allocation4 + $0xd8] sm:$0xff]
    %v120 = vld [vmem:[#allocation4 + $0xe0] sm:$0xff]
    %v121 = vld [vmem:[#allocation4 + $0xe8] sm:$0xff]
    %v122 = vld [vmem:[#allocation4 + $0xf0] sm:$0xff]
    %v123 = vld [vmem:[#allocation4 + $0xf8] sm:$0xff]
    %v124 = vld [vmem:[#allocation4 + $0x100] sm:$0xff]
    %v125 = vld [vmem:[#allocation4 + $0x108] sm:$0xff]
    %v126 = vld [vmem:[#allocation4 + $0x110] sm:$0xff]
    %v127 = vld [vmem:[#allocation4 + $0x118] sm:$0xff]
    %v128 = vld [vmem:[#allocation4 + $0x120] sm:$0xff]
    %v129 = vld [vmem:[#allocation4 + $0x128] sm:$0xff]
    %v130 = vld [vmem:[#allocation4 + $0x130] sm:$0xff]
    %v131 = vld [vmem:[#allocation4 + $0x138] sm:$0xff]
    %v132 = vld [vmem:[#allocation4 + $0x140] sm:$0xff]
    %v133 = vld [vmem:[#allocation4 + $0x148] sm:$0xff]
    %v134 = vld [vmem:[#allocation4 + $0x150] sm:$0xff]
    %v135 = vld [vmem:[#allocation4 + $0x158] sm:$0xff]
    %v136 = vld [vmem:[#allocation4 + $0x160] sm:$0xff]
    %v137 = vld [vmem:[#allocation4 + $0x168] sm:$0xff]
    %v138 = vld [vmem:[#allocation4 + $0x170] sm:$0xff]
    %v139 = vld [vmem:[#allocation4 + $0x178] sm:$0xff]
    %v140 = vld [vmem:[#allocation4 + $0x180] sm:$0xff]
    %v141 = vld [vmem:[#allocation4 + $0x188] sm:$0xff]
    %v142 = vld [vmem:[#allocation4 + $0x190] sm:$0xff]
    %v143 = vld [vmem:[#allocation4 + $0x198] sm:$0xff]
    %v144 = vld [vmem:[#allocation4 + $0x1a0] sm:$0xff]
    %v145 = vld [vmem:[#allocation4 + $0x1a8] sm:$0xff]
    %v146 = vld [vmem:[#allocation4 + $0x1b0] sm:$0xff]
    %v147 = vld [vmem:[#allocation4 + $0x1b8] sm:$0xff]
    %v148 = vld [vmem:[#allocation4 + $0x1c0] sm:$0xff]
    %v149 = vld [vmem:[#allocation4 + $0x1c8] sm:$0xff]
    %v150 = vld [vmem:[#allocation4 + $0x1d0] sm:$0xff]
    %v151 = vld [vmem:[#allocation4 + $0x1d8] sm:$0xff]
    %v152 = vld [vmem:[#allocation4 + $0x1e0] sm:$0xff]
    %v153 = vld [vmem:[#allocation4 + $0x1e8] sm:$0xff]
    %v154 = vld [vmem:[#allocation4 + $0x1f0] sm:$0xff]
    %v155 = vld [vmem:[#allocation4 + $0x1f8] sm:$0xff]
    %v156 = vld [vmem:[#allocation4 + $0x200] sm:$0xff]
    %v157 = vld [vmem:[#allocation4 + $0x208] sm:$0xff]
    %v158 = vld [vmem:[#allocation4 + $0x210] sm:$0xff]
    %v159 = vld [vmem:[#allocation4 + $0x218] sm:$0xff]
    %v160 = vld [vmem:[#allocation4 + $0x220] sm:$0xff]
    %v161 = vld [vmem:[#allocation4 + $0x228] sm:$0xff]
    %v162 = vld [vmem:[#allocation4 + $0x230] sm:$0xff]
    %v163 = vld [vmem:[#allocation4 + $0x238] sm:$0xff]
    %v164 = vld [vmem:[#allocation4 + $0x240] sm:$0xff]
    %v165 = vld [vmem:[#allocation4 + $0x248] sm:$0xff]
    %v166 = vld [vmem:[#allocation4 + $0x250] sm:$0xff]
    %v167 = vld [vmem:[#allocation4 + $0x258] sm:$0xff]
    %v168 = vld [vmem:[#allocation4 + $0x260] sm:$0xff]
    %v169 = vld [vmem:[#allocation4 + $0x268] sm:$0xff]
    %v170 = vld [vmem:[#allocation4 + $0x270] sm:$0xff]
    %v171 = vld [vmem:[#allocation4 + $0x278] sm:$0xff]
    %v172 = vld [vmem:[#allocation4 + $0x280] sm:$0xff]
    %v173 = vld [vmem:[#allocation4 + $0x288] sm:$0xff]
    %v174 = vld [vmem:[#allocation4 + $0x290] sm:$0xff]
    %v175 = vld [vmem:[#allocation4 + $0x298] sm:$0xff]
    %v176 = vld [vmem:[#allocation4 + $0x2a0] sm:$0xff]
    %v177 = vld [vmem:[#allocation4 + $0x2a8] sm:$0xff]
    %v178 = vld [vmem:[#allocation4 + $0x2b0] sm:$0xff]
    %v179 = vld [vmem:[#allocation4 + $0x2b8] sm:$0xff]
    %v180 = vld [vmem:[#allocation4 + $0x2c0] sm:$0xff]
    %v181 = vld [vmem:[#allocation4 + $0x2c8] sm:$0xff]
    %v182 = vld [vmem:[#allocation4 + $0x2d0] sm:$0xff]
    %v183 = vld [vmem:[#allocation4 + $0x2d8] sm:$0xff]
    %v184 = vld [vmem:[#allocation4 + $0x2e0] sm:$0xff]
    %v185 = vld [vmem:[#allocation4 + $0x2e8] sm:$0xff]
    %v186 = vld [vmem:[#allocation4 + $0x2f0] sm:$0xff]
    %v187 = vld [vmem:[#allocation4 + $0x2f8] sm:$0xff]
    %v188 = vld [vmem:[#allocation4 + $0x300] sm:$0xff]
    %v189 = vld [vmem:[#allocation4 + $0x308] sm:$0xff]
    %v190 = vld [vmem:[#allocation4 + $0x310] sm:$0xff]
    %v191 = vld [vmem:[#allocation4 + $0x318] sm:$0xff]
    %v192 = vld [vmem:[#allocation4 + $0x320] sm:$0xff]
    %v193 = vld [vmem:[#allocation4 + $0x328] sm:$0xff]
    %v194 = vld [vmem:[#allocation4 + $0x330] sm:$0xff]
    %v195 = vld [vmem:[#allocation4 + $0x338] sm:$0xff]
    %v196 = vld [vmem:[#allocation4 + $0x340] sm:$0xff]
    %v197 = vld [vmem:[#allocation4 + $0x348] sm:$0xff]
    %v198 = vld [vmem:[#allocation4 + $0x350] sm:$0xff]
    %v199 = vld [vmem:[#allocation4 + $0x358] sm:$0xff]
    %v200 = vld [vmem:[#allocation4 + $0x360] sm:$0xff]
    %v201 = vld [vmem:[#allocation4 + $0x368] sm:$0xff]
    %v202 = vld [vmem:[#allocation4 + $0x370] sm:$0xff]
    %v203 = vld [vmem:[#allocation4 + $0x378] sm:$0xff]
    %v204 = vld [vmem:[#allocation4 + $0x380] sm:$0xff]
    %v205 = vld [vmem:[#allocation4 + $0x388] sm:$0xff]
    %v206 = vld [vmem:[#allocation4 + $0x390] sm:$0xff]
    %v207 = vld [vmem:[#allocation4 + $0x398] sm:$0xff]
    %v208 = vld [vmem:[#allocation4 + $0x3a0] sm:$0xff]
    %v209 = vld [vmem:[#allocation4 + $0x3a8] sm:$0xff]
    %v210 = vld [vmem:[#allocation4 + $0x3b0] sm:$0xff]
    %v211 = vld [vmem:[#allocation4 + $0x3b8] sm:$0xff]
    %v212 = vld [vmem:[#allocation4 + $0x3c0] sm:$0xff]
    %v213 = vld [vmem:[#allocation4 + $0x3c8] sm:$0xff]
    %v214 = vld [vmem:[#allocation4 + $0x3d0] sm:$0xff]
    %v215 = vld [vmem:[#allocation4 + $0x3d8] sm:$0xff]
    %v216 = vld [vmem:[#allocation4 + $0x3e0] sm:$0xff]
    %v217 = vld [vmem:[#allocation4 + $0x3e8] sm:$0xff]
    %v218 = vld [vmem:[#allocation4 + $0x3f0] sm:$0xff]
    %v219 = vld [vmem:[#allocation4 + $0x3f8] sm:$0xff]
    %v220 = vld [vmem:[%s2] sm:$0x3]
    %v222 = vperm.slane %v220, 0
    %v223 = vperm.slane %v220, 1
    %226 = vmatpush.msra.mxu0 %v122
    %227 = vmatpush.msra.mxu0 %v120
    %228 = vmatpush.msra.mxu0 %v118
    %229 = vmatpush.msra.mxu0 %v116
    %230 = vmatpush.msra.mxu0 %v114
    %231 = vmatpush.msra.mxu0 %v112
    %232 = vmatpush.msra.mxu0 %v110
    %233 = vmatpush.msra.mxu0 %v108
    %234 = vmatpush.msra.mxu0 %v106
    %235 = vmatpush.msra.mxu0 %v104
    %236 = vmatpush.msra.mxu0 %v102
    %237 = vmatpush.msra.mxu0 %v100
    %238 = vmatpush.msra.mxu0 %v98
    %239 = vmatpush.msra.mxu0 %v96
    %240 = vmatpush.msra.mxu0 %v94
    %241 = vmatpush.msra.mxu0 %v92
    %242 = vmatmul.f32.gmra.mxu0 %v84
    %v243 = vpop.f32.mrf.mxu0
    %v244 = vadd.f32 %v222, %v243
    %245 = vmatmul.f32.gmra.mxu0 %v88
    %v246 = vpop.f32.mrf.mxu0
    %v247 = vadd.f32 %v222, %v246
    %248 = vdwg.mxu0
    %249 = vmatpush.msra.mxu0 %v154
    %250 = vmatpush.msra.mxu0 %v152
    %251 = vmatpush.msra.mxu0 %v150
    %252 = vmatpush.msra.mxu0 %v148
    %253 = vmatpush.msra.mxu0 %v146
    %254 = vmatpush.msra.mxu0 %v144
    %255 = vmatpush.msra.mxu0 %v142
    %256 = vmatpush.msra.mxu0 %v140
    %257 = vmatpush.msra.mxu0 %v138
    %258 = vmatpush.msra.mxu0 %v136
    %259 = vmatpush.msra.mxu0 %v134
    %260 = vmatpush.msra.mxu0 %v132
    %261 = vmatpush.msra.mxu0 %v130
    %262 = vmatpush.msra.mxu0 %v128
    %263 = vmatpush.msra.mxu0 %v126
    %264 = vmatpush.msra.mxu0 %v124
    %265 = vmatmul.f32.gmra.mxu0 %v85
    %v266 = vpop.f32.mrf.mxu0
    %v267 = vadd.f32 %v244, %v266
    %268 = vmatmul.f32.gmra.mxu0 %v89
    %v269 = vpop.f32.mrf.mxu0
    %v270 = vadd.f32 %v247, %v269
    %271 = vdwg.mxu0
    %272 = vmatpush.msra.mxu0 %v186
    %273 = vmatpush.msra.mxu0 %v184
    %274 = vmatpush.msra.mxu0 %v182
    %275 = vmatpush.msra.mxu0 %v180
    %276 = vmatpush.msra.mxu0 %v178
    %277 = vmatpush.msra.mxu0 %v176
    %278 = vmatpush.msra.mxu0 %v174
    %279 = vmatpush.msra.mxu0 %v172
    %280 = vmatpush.msra.mxu0 %v170
    %281 = vmatpush.msra.mxu0 %v168
    %282 = vmatpush.msra.mxu0 %v166
    %283 = vmatpush.msra.mxu0 %v164
    %284 = vmatpush.msra.mxu0 %v162
    %285 = vmatpush.msra.mxu0 %v160
    %286 = vmatpush.msra.mxu0 %v158
    %287 = vmatpush.msra.mxu0 %v156
    %288 = vmatmul.f32.gmra.mxu0 %v86
    %v289 = vpop.f32.mrf.mxu0
    %v290 = vadd.f32 %v267, %v289
    %291 = vmatmul.f32.gmra.mxu0 %v90
    %v292 = vpop.f32.mrf.mxu0
    %v293 = vadd.f32 %v270, %v292
    %294 = vdwg.mxu0
    %295 = vmatpush.msra.mxu0 %v218
    %296 = vmatpush.msra.mxu0 %v216
    %297 = vmatpush.msra.mxu0 %v214
    %298 = vmatpush.msra.mxu0 %v212
    %299 = vmatpush.msra.mxu0 %v210
    %300 = vmatpush.msra.mxu0 %v208
    %301 = vmatpush.msra.mxu0 %v206
    %302 = vmatpush.msra.mxu0 %v204
    %303 = vmatpush.msra.mxu0 %v202
    %304 = vmatpush.msra.mxu0 %v200
    %305 = vmatpush.msra.mxu0 %v198
    %306 = vmatpush.msra.mxu0 %v196
    %307 = vmatpush.msra.mxu0 %v194
    %308 = vmatpush.msra.mxu0 %v192
    %309 = vmatpush.msra.mxu0 %v190
    %310 = vmatpush.msra.mxu0 %v188
    %311 = vmatmul.f32.gmra.mxu0 %v87
    %v312 = vpop.f32.mrf.mxu0
    %v313 = vadd.f32 %v290, %v312
    %314 = vmatmul.f32.gmra.mxu0 %v91
    %v315 = vpop.f32.mrf.mxu0
    %v316 = vadd.f32 %v293, %v315
    %317 = vdwg.mxu0
    %318 = vmatpush.msra.mxu0 %v123
    %319 = vmatpush.msra.mxu0 %v121
    %320 = vmatpush.msra.mxu0 %v119
    %321 = vmatpush.msra.mxu0 %v117
    %322 = vmatpush.msra.mxu0 %v115
    %323 = vmatpush.msra.mxu0 %v113
    %324 = vmatpush.msra.mxu0 %v111
    %325 = vmatpush.msra.mxu0 %v109
    %326 = vmatpush.msra.mxu0 %v107
    %327 = vmatpush.msra.mxu0 %v105
    %328 = vmatpush.msra.mxu0 %v103
    %329 = vmatpush.msra.mxu0 %v101
    %330 = vmatpush.msra.mxu0 %v99
    %331 = vmatpush.msra.mxu0 %v97
    %332 = vmatpush.msra.mxu0 %v95
    %333 = vmatpush.msra.mxu0 %v93
    %334 = vmatmul.f32.gmra.mxu0 %v84
    %v335 = vpop.f32.mrf.mxu0
    %v336 = vadd.f32 %v223, %v335
    %337 = vmatmul.f32.gmra.mxu0 %v88
    %v338 = vpop.f32.mrf.mxu0
    %v339 = vadd.f32 %v223, %v338
    %340 = vdwg.mxu0
    %341 = vmatpush.msra.mxu0 %v155
    %342 = vmatpush.msra.mxu0 %v153
    %343 = vmatpush.msra.mxu0 %v151
    %344 = vmatpush.msra.mxu0 %v149
    %345 = vmatpush.msra.mxu0 %v147
    %346 = vmatpush.msra.mxu0 %v145
    %347 = vmatpush.msra.mxu0 %v143
    %348 = vmatpush.msra.mxu0 %v141
    %349 = vmatpush.msra.mxu0 %v139
    %350 = vmatpush.msra.mxu0 %v137
    %351 = vmatpush.msra.mxu0 %v135
    %352 = vmatpush.msra.mxu0 %v133
    %353 = vmatpush.msra.mxu0 %v131
    %354 = vmatpush.msra.mxu0 %v129
    %355 = vmatpush.msra.mxu0 %v127
    %356 = vmatpush.msra.mxu0 %v125
    %357 = vmatmul.f32.gmra.mxu0 %v85
    %v358 = vpop.f32.mrf.mxu0
    %v359 = vadd.f32 %v336, %v358
    %360 = vmatmul.f32.gmra.mxu0 %v89
    %v361 = vpop.f32.mrf.mxu0
    %v362 = vadd.f32 %v339, %v361
    %363 = vdwg.mxu0
    %364 = vmatpush.msra.mxu0 %v187
    %365 = vmatpush.msra.mxu0 %v185
    %366 = vmatpush.msra.mxu0 %v183
    %367 = vmatpush.msra.mxu0 %v181
    %368 = vmatpush.msra.mxu0 %v179
    %369 = vmatpush.msra.mxu0 %v177
    %370 = vmatpush.msra.mxu0 %v175
    %371 = vmatpush.msra.mxu0 %v173
    %372 = vmatpush.msra.mxu0 %v171
    %373 = vmatpush.msra.mxu0 %v169
    %374 = vmatpush.msra.mxu0 %v167
    %375 = vmatpush.msra.mxu0 %v165
    %376 = vmatpush.msra.mxu0 %v163
    %377 = vmatpush.msra.mxu0 %v161
    %378 = vmatpush.msra.mxu0 %v159
    %379 = vmatpush.msra.mxu0 %v157
    %380 = vmatmul.f32.gmra.mxu0 %v86
    %v381 = vpop.f32.mrf.mxu0
    %v382 = vadd.f32 %v359, %v381
    %383 = vmatmul.f32.gmra.mxu0 %v90
    %v384 = vpop.f32.mrf.mxu0
    %v385 = vadd.f32 %v362, %v384
    %386 = vdwg.mxu0
    %387 = vmatpush.msra.mxu0 %v219
    %388 = vmatpush.msra.mxu0 %v217
    %389 = vmatpush.msra.mxu0 %v215
    %390 = vmatpush.msra.mxu0 %v213
    %391 = vmatpush.msra.mxu0 %v211
    %392 = vmatpush.msra.mxu0 %v209
    %393 = vmatpush.msra.mxu0 %v207
    %394 = vmatpush.msra.mxu0 %v205
    %395 = vmatpush.msra.mxu0 %v203
    %396 = vmatpush.msra.mxu0 %v201
    %397 = vmatpush.msra.mxu0 %v199
    %398 = vmatpush.msra.mxu0 %v197
    %399 = vmatpush.msra.mxu0 %v195
    %400 = vmatpush.msra.mxu0 %v193
    %401 = vmatpush.msra.mxu0 %v191
    %402 = vmatpush.msra.mxu0 %v189
    %403 = vmatmul.f32.gmra.mxu0 %v87
    %v404 = vpop.f32.mrf.mxu0
    %v405 = vadd.f32 %v382, %v404
    %406 = vmatmul.f32.gmra.mxu0 %v91
    %v407 = vpop.f32.mrf.mxu0
    %v408 = vadd.f32 %v385, %v407
    %409 = vdwg.mxu0
    %v410 = vmul.f32 %v313, 0.5
    %v411 = vmul.f32 %v405, 0.5
    %v412 = vmul.f32 %v316, 0.5
    %v413 = vmul.f32 %v408, 0.5
    %v414 = vmul.f32 %v313, 0.70710677
    %v415 = vmul.f32 %v405, 0.70710677
    %v416 = vmul.f32 %v316, 0.70710677
    %v417 = vmul.f32 %v408, 0.70710677
    %v418 = vmul.f32 %v414, %v414
    %v419 = vmin.f32 16.0, %v418
    %v420 = vmul.f32 %v419, 2.1237322e-06
    %v421 = vadd.f32 %v420, 0.00028619796
    %v422 = vmul.f32 %v419, %v421
    %v423 = vadd.f32 %v422, 0.0036580483
    %v424 = vmul.f32 %v419, %v423
    %v425 = vadd.f32 %v424, 0.05243302
    %v426 = vmul.f32 %v419, %v425
    %v427 = vadd.f32 %v426, 0.18741608
    %v428 = vmul.f32 %v419, %v427
    %v429 = vadd.f32 %v428, 1.1283791
    %v430 = vmul.f32 %v414, %v429
    %v431 = vmul.f32 %v419, 3.8918573e-05
    %v432 = vadd.f32 %v431, 0.001143296
    %v433 = vmul.f32 %v419, %v432
    %v434 = vadd.f32 %v433, 0.014752088
    %v435 = vmul.f32 %v419, %v434
    %v436 = vadd.f32 %v435, 0.112945676
    %v437 = vmul.f32 %v419, %v436
    %v438 = vadd.f32 %v437, 0.4994258
    %v439 = vmul.f32 %v419, %v438
    %v440 = vadd.f32 %v439, 1.0
    %v441 = vrcp.pop %v440
    %v442 = vmul.f32 %v440, %v441
    %v443 = vsub.f32 1.0, %v442
    %v444 = vmul.f32 %v441, %v443
    %v445 = vadd.f32 %v441, %v444
    %vm446 = vweird.f32 %v440
    %vm447 = vweird.f32 %v441
    %vm448 = vmor %vm446, %vm447
    %v449 = vsel %vm448, %v441, %v445
    %v450 = vand.u32 2147483647, %v440
    %vm451 = vcmp.eq.f32.partialorder %v450, 8.507059e+37
    %v452 = vand.u32 %v440, 2147483648
    %v453 = vor.u32 1.1754944e-38, %v452
    %v454 = vsel %vm451, %v453, %v449
    %v455 = vmul.f32 %v430, %v454
    %v456 = vmin.f32 %v455, 1.0
    %v457 = vmax.f32 %v456, -1.0
    %v458 = vmul.f32 %v415, %v415
    %v459 = vmin.f32 16.0, %v458
    %v460 = vmul.f32 %v459, 2.1237322e-06
    %v461 = vadd.f32 %v460, 0.00028619796
    %v462 = vmul.f32 %v459, %v461
    %v463 = vadd.f32 %v462, 0.0036580483
    %v464 = vmul.f32 %v459, %v463
    %v465 = vadd.f32 %v464, 0.05243302
    %v466 = vmul.f32 %v459, %v465
    %v467 = vadd.f32 %v466, 0.18741608
    %v468 = vmul.f32 %v459, %v467
    %v469 = vadd.f32 %v468, 1.1283791
    %v470 = vmul.f32 %v415, %v469
    %v471 = vmul.f32 %v459, 3.8918573e-05
    %v472 = vadd.f32 %v471, 0.001143296
    %v473 = vmul.f32 %v459, %v472
    %v474 = vadd.f32 %v473, 0.014752088
    %v475 = vmul.f32 %v459, %v474
    %v476 = vadd.f32 %v475, 0.112945676
    %v477 = vmul.f32 %v459, %v476
    %v478 = vadd.f32 %v477, 0.4994258
    %v479 = vmul.f32 %v459, %v478
    %v480 = vadd.f32 %v479, 1.0
    %v481 = vrcp.pop %v480
    %v482 = vmul.f32 %v480, %v481
    %v483 = vsub.f32 1.0, %v482
    %v484 = vmul.f32 %v481, %v483
    %v485 = vadd.f32 %v481, %v484
    %vm486 = vweird.f32 %v480
    %vm487 = vweird.f32 %v481
    %vm488 = vmor %vm486, %vm487
    %v489 = vsel %vm488, %v481, %v485
    %v490 = vand.u32 2147483647, %v480
    %vm491 = vcmp.eq.f32.partialorder %v490, 8.507059e+37
    %v492 = vand.u32 %v480, 2147483648
    %v493 = vor.u32 1.1754944e-38, %v492
    %v494 = vsel %vm491, %v493, %v489
    %v495 = vmul.f32 %v470, %v494
    %v496 = vmin.f32 %v495, 1.0
    %v497 = vmax.f32 %v496, -1.0
    %v498 = vmul.f32 %v416, %v416
    %v499 = vmin.f32 16.0, %v498
    %v500 = vmul.f32 %v499, 2.1237322e-06
    %v501 = vadd.f32 %v500, 0.00028619796
    %v502 = vmul.f32 %v499, %v501
    %v503 = vadd.f32 %v502, 0.0036580483
    %v504 = vmul.f32 %v499, %v503
    %v505 = vadd.f32 %v504, 0.05243302
    %v506 = vmul.f32 %v499, %v505
    %v507 = vadd.f32 %v506, 0.18741608
    %v508 = vmul.f32 %v499, %v507
    %v509 = vadd.f32 %v508, 1.1283791
    %v510 = vmul.f32 %v416, %v509
    %v511 = vmul.f32 %v499, 3.8918573e-05
    %v512 = vadd.f32 %v511, 0.001143296
    %v513 = vmul.f32 %v499, %v512
    %v514 = vadd.f32 %v513, 0.014752088
    %v515 = vmul.f32 %v499, %v514
    %v516 = vadd.f32 %v515, 0.112945676
    %v517 = vmul.f32 %v499, %v516
    %v518 = vadd.f32 %v517, 0.4994258
    %v519 = vmul.f32 %v499, %v518
    %v520 = vadd.f32 %v519, 1.0
    %v521 = vrcp.pop %v520
    %v522 = vmul.f32 %v520, %v521
    %v523 = vsub.f32 1.0, %v522
    %v524 = vmul.f32 %v521, %v523
    %v525 = vadd.f32 %v521, %v524
    %vm526 = vweird.f32 %v520
    %vm527 = vweird.f32 %v521
    %vm528 = vmor %vm526, %vm527
    %v529 = vsel %vm528, %v521, %v525
    %v530 = vand.u32 2147483647, %v520
    %vm531 = vcmp.eq.f32.partialorder %v530, 8.507059e+37
    %v532 = vand.u32 %v520, 2147483648
    %v533 = vor.u32 1.1754944e-38, %v532
    %v534 = vsel %vm531, %v533, %v529
    %v535 = vmul.f32 %v510, %v534
    %v536 = vmin.f32 %v535, 1.0
    %v537 = vmax.f32 %v536, -1.0
    %v538 = vmul.f32 %v417, %v417
    %v539 = vmin.f32 16.0, %v538
    %v540 = vmul.f32 %v539, 2.1237322e-06
    %v541 = vadd.f32 %v540, 0.00028619796
    %v542 = vmul.f32 %v539, %v541
    %v543 = vadd.f32 %v542, 0.0036580483
    %v544 = vmul.f32 %v539, %v543
    %v545 = vadd.f32 %v544, 0.05243302
    %v546 = vmul.f32 %v539, %v545
    %v547 = vadd.f32 %v546, 0.18741608
    %v548 = vmul.f32 %v539, %v547
    %v549 = vadd.f32 %v548, 1.1283791
    %v550 = vmul.f32 %v417, %v549
    %v551 = vmul.f32 %v539, 3.8918573e-05
    %v552 = vadd.f32 %v551, 0.001143296
    %v553 = vmul.f32 %v539, %v552
    %v554 = vadd.f32 %v553, 0.014752088
    %v555 = vmul.f32 %v539, %v554
    %v556 = vadd.f32 %v555, 0.112945676
    %v557 = vmul.f32 %v539, %v556
    %v558 = vadd.f32 %v557, 0.4994258
    %v559 = vmul.f32 %v539, %v558
    %v560 = vadd.f32 %v559, 1.0
    %v561 = vrcp.pop %v560
    %v562 = vmul.f32 %v560, %v561
    %v563 = vsub.f32 1.0, %v562
    %v564 = vmul.f32 %v561, %v563
    %v565 = vadd.f32 %v561, %v564
    %vm566 = vweird.f32 %v560
    %vm567 = vweird.f32 %v561
    %vm568 = vmor %vm566, %vm567
    %v569 = vsel %vm568, %v561, %v565
    %v570 = vand.u32 2147483647, %v560
    %vm571 = vcmp.eq.f32.partialorder %v570, 8.507059e+37
    %v572 = vand.u32 %v560, 2147483648
    %v573 = vor.u32 1.1754944e-38, %v572
    %v574 = vsel %vm571, %v573, %v569
    %v575 = vmul.f32 %v550, %v574
    %v576 = vmin.f32 %v575, 1.0
    %v577 = vmax.f32 %v576, -1.0
    %v578 = vadd.f32 %v457, 1.0
    %v579 = vadd.f32 %v497, 1.0
    %v580 = vadd.f32 %v537, 1.0
    %v581 = vadd.f32 %v577, 1.0
    %v582 = vmul.f32 %v410, %v578
    %v583 = vmul.f32 %v411, %v579
    %v584 = vmul.f32 %v412, %v580
    %v585 = vmul.f32 %v413, %v581
    %v586 = vld [vmem:[#allocation6] sm:$0xff]
    %v587 = vld [vmem:[#allocation6 + $0x8] sm:$0xff]
    %v588 = vld [vmem:[#allocation6 + $0x10] sm:$0xff]
    %v589 = vld [vmem:[#allocation6 + $0x18] sm:$0xff]
    %v590 = vld [vmem:[#allocation6 + $0x20] sm:$0xff]
    %v591 = vld [vmem:[#allocation6 + $0x28] sm:$0xff]
    %v592 = vld [vmem:[#allocation6 + $0x30] sm:$0xff]
    %v593 = vld [vmem:[#allocation6 + $0x38] sm:$0xff]
    %v594 = vld [vmem:[#allocation6 + $0x40] sm:$0xff]
    %v595 = vld [vmem:[#allocation6 + $0x48] sm:$0xff]
    %v596 = vld [vmem:[#allocation6 + $0x50] sm:$0xff]
    %v597 = vld [vmem:[#allocation6 + $0x58] sm:$0xff]
    %v598 = vld [vmem:[#allocation6 + $0x60] sm:$0xff]
    %v599 = vld [vmem:[#allocation6 + $0x68] sm:$0xff]
    %v600 = vld [vmem:[#allocation6 + $0x70] sm:$0xff]
    %v601 = vld [vmem:[#allocation6 + $0x78] sm:$0xff]
    %v602 = vld [vmem:[#allocation6 + $0x80] sm:$0xff]
    %v603 = vld [vmem:[#allocation6 + $0x88] sm:$0xff]
    %v604 = vld [vmem:[#allocation6 + $0x90] sm:$0xff]
    %v605 = vld [vmem:[#allocation6 + $0x98] sm:$0xff]
    %v606 = vld [vmem:[#allocation6 + $0xa0] sm:$0xff]
    %v607 = vld [vmem:[#allocation6 + $0xa8] sm:$0xff]
    %v608 = vld [vmem:[#allocation6 + $0xb0] sm:$0xff]
    %v609 = vld [vmem:[#allocation6 + $0xb8] sm:$0xff]
    %v610 = vld [vmem:[#allocation6 + $0xc0] sm:$0xff]
    %v611 = vld [vmem:[#allocation6 + $0xc8] sm:$0xff]
    %v612 = vld [vmem:[#allocation6 + $0xd0] sm:$0xff]
    %v613 = vld [vmem:[#allocation6 + $0xd8] sm:$0xff]
    %v614 = vld [vmem:[#allocation6 + $0xe0] sm:$0xff]
    %v615 = vld [vmem:[#allocation6 + $0xe8] sm:$0xff]
    %v616 = vld [vmem:[#allocation6 + $0xf0] sm:$0xff]
    %v617 = vld [vmem:[#allocation6 + $0xf8] sm:$0xff]
    %v618 = vld [vmem:[%s4] sm:$0x1]
    %v620 = vperm.slane %v618, 0
    %622 = vmatpush.msra.mxu0 %v601
    %623 = vmatpush.msra.mxu0 %v600
    %624 = vmatpush.msra.mxu0 %v599
    %625 = vmatpush.msra.mxu0 %v598
    %626 = vmatpush.msra.mxu0 %v597
    %627 = vmatpush.msra.mxu0 %v596
    %628 = vmatpush.msra.mxu0 %v595
    %629 = vmatpush.msra.mxu0 %v594
    %630 = vmatpush.msra.mxu0 %v593
    %631 = vmatpush.msra.mxu0 %v592
    %632 = vmatpush.msra.mxu0 %v591
    %633 = vmatpush.msra.mxu0 %v590
    %634 = vmatpush.msra.mxu0 %v589
    %635 = vmatpush.msra.mxu0 %v588
    %636 = vmatpush.msra.mxu0 %v587
    %637 = vmatpush.msra.mxu0 %v586
    %638 = vmatmul.f32.gmra.mxu0 %v582
    %v639 = vpop.f32.mrf.mxu0
    %v640 = vadd.f32 %v620, %v639
    %641 = vmatmul.f32.gmra.mxu0 %v584
    %v642 = vpop.f32.mrf.mxu0
    %v643 = vadd.f32 %v620, %v642
    %644 = vdwg.mxu0
    %645 = vmatpush.msra.mxu0 %v617
    %646 = vmatpush.msra.mxu0 %v616
    %647 = vmatpush.msra.mxu0 %v615
    %648 = vmatpush.msra.mxu0 %v614
    %649 = vmatpush.msra.mxu0 %v613
    %650 = vmatpush.msra.mxu0 %v612
    %651 = vmatpush.msra.mxu0 %v611
    %652 = vmatpush.msra.mxu0 %v610
    %653 = vmatpush.msra.mxu0 %v609
    %654 = vmatpush.msra.mxu0 %v608
    %655 = vmatpush.msra.mxu0 %v607
    %656 = vmatpush.msra.mxu0 %v606
    %657 = vmatpush.msra.mxu0 %v605
    %658 = vmatpush.msra.mxu0 %v604
    %659 = vmatpush.msra.mxu0 %v603
    %660 = vmatpush.msra.mxu0 %v602
    %661 = vmatmul.f32.gmra.mxu0 %v583
    %v662 = vpop.f32.mrf.mxu0
    %v663 = vadd.f32 %v640, %v662
    %664 = vmatmul.f32.gmra.mxu0 %v585
    %v665 = vpop.f32.mrf.mxu0
    %v666 = vadd.f32 %v643, %v665
    %667 = vdwg.mxu0
    %v668 = vmul.f32 %v663, 0.5
    %v669 = vmul.f32 %v666, 0.5
    %v670 = vmul.f32 %v663, 0.70710677
    %v671 = vmul.f32 %v666, 0.70710677
    %v672 = vmul.f32 %v670, %v670
    %v673 = vmin.f32 16.0, %v672
    %v674 = vmul.f32 %v673, 2.1237322e-06
    %v675 = vadd.f32 %v674, 0.00028619796
    %v676 = vmul.f32 %v673, %v675
    %v677 = vadd.f32 %v676, 0.0036580483
    %v678 = vmul.f32 %v673, %v677
    %v679 = vadd.f32 %v678, 0.05243302
    %v680 = vmul.f32 %v673, %v679
    %v681 = vadd.f32 %v680, 0.18741608
    %v682 = vmul.f32 %v673, %v681
    %v683 = vadd.f32 %v682, 1.1283791
    %v684 = vmul.f32 %v670, %v683
    %v685 = vmul.f32 %v673, 3.8918573e-05
    %v686 = vadd.f32 %v685, 0.001143296
    %v687 = vmul.f32 %v673, %v686
    %v688 = vadd.f32 %v687, 0.014752088
    %v689 = vmul.f32 %v673, %v688
    %v690 = vadd.f32 %v689, 0.112945676
    %v691 = vmul.f32 %v673, %v690
    %v692 = vadd.f32 %v691, 0.4994258
    %v693 = vmul.f32 %v673, %v692
    %v694 = vadd.f32 %v693, 1.0
    %v695 = vrcp.pop %v694
    %v696 = vmul.f32 %v694, %v695
    %v697 = vsub.f32 1.0, %v696
    %v698 = vmul.f32 %v695, %v697
    %v699 = vadd.f32 %v695, %v698
    %vm700 = vweird.f32 %v694
    %vm701 = vweird.f32 %v695
    %vm702 = vmor %vm700, %vm701
    %v703 = vsel %vm702, %v695, %v699
    %v704 = vand.u32 2147483647, %v694
    %vm705 = vcmp.eq.f32.partialorder %v704, 8.507059e+37
    %v706 = vand.u32 %v694, 2147483648
    %v707 = vor.u32 1.1754944e-38, %v706
    %v708 = vsel %vm705, %v707, %v703
    %v709 = vmul.f32 %v684, %v708
    %v710 = vmin.f32 %v709, 1.0
    %v711 = vmax.f32 %v710, -1.0
    %v712 = vmul.f32 %v671, %v671
    %v713 = vmin.f32 16.0, %v712
    %v714 = vmul.f32 %v713, 2.1237322e-06
    %v715 = vadd.f32 %v714, 0.00028619796
    %v716 = vmul.f32 %v713, %v715
    %v717 = vadd.f32 %v716, 0.0036580483
    %v718 = vmul.f32 %v713, %v717
    %v719 = vadd.f32 %v718, 0.05243302
    %v720 = vmul.f32 %v713, %v719
    %v721 = vadd.f32 %v720, 0.18741608
    %v722 = vmul.f32 %v713, %v721
    %v723 = vadd.f32 %v722, 1.1283791
    %v724 = vmul.f32 %v671, %v723
    %v725 = vmul.f32 %v713, 3.8918573e-05
    %v726 = vadd.f32 %v725, 0.001143296
    %v727 = vmul.f32 %v713, %v726
    %v728 = vadd.f32 %v727, 0.014752088
    %v729 = vmul.f32 %v713, %v728
    %v730 = vadd.f32 %v729, 0.112945676
    %v731 = vmul.f32 %v713, %v730
    %v732 = vadd.f32 %v731, 0.4994258
    %v733 = vmul.f32 %v713, %v732
    %v734 = vadd.f32 %v733, 1.0
    %v735 = vrcp.pop %v734
    %v736 = vmul.f32 %v734, %v735
    %v737 = vsub.f32 1.0, %v736
    %v738 = vmul.f32 %v735, %v737
    %v739 = vadd.f32 %v735, %v738
    %vm740 = vweird.f32 %v734
    %vm741 = vweird.f32 %v735
    %vm742 = vmor %vm740, %vm741
    %v743 = vsel %vm742, %v735, %v739
    %v744 = vand.u32 2147483647, %v734
    %vm745 = vcmp.eq.f32.partialorder %v744, 8.507059e+37
    %v746 = vand.u32 %v734, 2147483648
    %v747 = vor.u32 1.1754944e-38, %v746
    %v748 = vsel %vm745, %v747, %v743
    %v749 = vmul.f32 %v724, %v748
    %v750 = vmin.f32 %v749, 1.0
    %v751 = vmax.f32 %v750, -1.0
    %v752 = vadd.f32 %v711, 1.0
    %v753 = vadd.f32 %v751, 1.0
    %v754 = vmul.f32 %v668, %v752
    %v755 = vmul.f32 %v669, %v753
    %v756 = vld [vmem:[#allocation7] sm:$0x1f]
    %757 = vmatpush.xpose.msra.mxu0 0.0
    %758 = vmatpush.xpose.msra.mxu0 0.0
    %759 = vmatpush.xpose.msra.mxu0 0.0
    %760 = vmatpush.xpose.msra.mxu0 0.0
    %761 = vmatpush.xpose.msra.mxu0 0.0
    %762 = vmatpush.xpose.msra.mxu0 0.0
    %763 = vmatpush.xpose.msra.mxu0 0.0
    %764 = vmatpush.xpose.msra.mxu0 0.0
    %765 = vmatpush.xpose.msra.mxu0 0.0
    %766 = vmatpush.xpose.msra.mxu0 0.0
    %767 = vmatpush.xpose.msra.mxu0 0.0
    %768 = vmatpush.xpose.msra.mxu0 0.0
    %769 = vmatpush.xpose.msra.mxu0 0.0
    %770 = vmatpush.xpose.msra.mxu0 0.0
    %771 = vmatpush.xpose.msra.mxu0 %v755
    %772 = vmatpush.xpose.msra.mxu0 %v754
    %773 = vmatmul.f32.gmra.mxu0 %v756
    %v774 = vpop.f32.mrf.mxu0
    %v775 = vadd.f32 0.0, %v774
    %776 = vdwg.mxu0
    %vm777 = vcmask 126976
    %778 = vst.msk [vmem:[%s6] sm:$0x1f] %vm777, %v775
    // Predicated region
    $region42: #{sleep_mlp_forward.1} parent=1 // pred_check
      _
    $region43: #{sleep_mlp_forward.1} parent=1 // pred_check_branch
      %780 = sbr.rel (0) target = $region45
    $region44: #{sleep_mlp_forward.1} parent=1 // pred_region
      _
    $region45: #{sleep_mlp_forward.1} parent=1 // pred_fallthru
      _
    // Predicated region
    $region46: #{sleep_mlp_forward.1} parent=1 // pred_check
      _
    $region47: #{sleep_mlp_forward.1} parent=1 // pred_check_branch
      %782 = sbr.rel (0) target = $region49
    $region48: #{sleep_mlp_forward.1} parent=1 // pred_region
      _
    $region49: #{sleep_mlp_forward.1} parent=1 // pred_fallthru
      _
    %783 = vsyncpa [#allocation3], 1
    %784 = vsyncpa [#allocation5], 1
    %785 = vsyncpa [#allocation8], 1

</llo_original>
